<compile_context>
chip_gen: v7x
topology: tpu7x:2x2x1
jax: 0.10.0
libtpu: 0.0.40
codegen_flags: <defaults>
</compile_context>

<pallas_src>
import functools

import jax
import jax.numpy as jnp
from jax.experimental import pallas as pl
from jax.experimental.pallas import tpu as pltpu


# -----------------------------------------------------------------------------
# Kernel 1: conv-as-matmul producing a lane-dense (C_out, tile_hw) block,
# with per-channel sum / sum-of-squares (BN pass 1) accumulated in the
# epilogue from the in-register f32 result.
# -----------------------------------------------------------------------------
def conv_stats_kernel(a_ref, w_ref, y_ref, sum_ref, sumsq_ref):
    a = a_ref[...]            # (K, tile_hw)   compute dtype, lane-dense
    w = w_ref[...]            # (C_out, K)     compute dtype
    # Plain (C_out, K) x (K, tile_hw) matmul -> (C_out, tile_hw), f32 accum.
    y = jax.lax.dot_general(
        w, a,
        dimension_numbers=(((1,), (0,)), ((), ())),
        preferred_element_type=jnp.float32,
    )
    y_ref[...] = y.astype(y_ref.dtype)   # bf16 writeback on the fast path

    # Per-(core-split, image) stats accumulator, resident across the innermost
    # ("arbitrary") spatial-tile grid axis.
    @pl.when(pl.program_id(2) == 0)
    def _init():
        sum_ref[...] = jnp.zeros_like(sum_ref)
        sumsq_ref[...] = jnp.zeros_like(sumsq_ref)

    sum_ref[...] += jnp.sum(y, axis=1, keepdims=True)
    sumsq_ref[...] += jnp.sum(y * y, axis=1, keepdims=True)


# -----------------------------------------------------------------------------
# Kernel 2: BatchNorm apply.  scale/shift are pre-folded on the host, so this
# is a pure streaming FMA limited by vld/vst + HBM.
# -----------------------------------------------------------------------------
def bn_apply_kernel(y_ref, scale_ref, shift_ref, o_ref):
    y = y_ref[...].astype(jnp.float32)
    o_ref[...] = (y * scale_ref[...] + shift_ref[...]).astype(o_ref.dtype)


# -----------------------------------------------------------------------------
# Host-side helpers
# -----------------------------------------------------------------------------
def _cdiv(a, b):
    return -(-a // b)


def _round_up(x, m):
    return ((x + m - 1) // m) * m


def _im2col_kmajor(x, kernel_size, stride, padding, dilation):
    """x: (N, C_in, H, W) -> patches (N, K, H_out*W_out), K = C_in*kh*kw.

    K is ordered (c_in, ki, kj), matching conv_w.reshape(C_out, C_in*kh*kw).
    HW is the lane axis, so the Pallas DMA rows are contiguous and the matmul
    needs no transposed RHS.  Caller applies LeakyReLU first.
    """
    n, c_in, h, w = x.shape
    kh = kw = kernel_size
    h_out = (h + 2 * padding - dilation * (kh - 1) - 1) // stride + 1
    w_out = (w + 2 * padding - dilation * (kw - 1) - 1) // stride + 1
    x_pad = jnp.pad(x, ((0, 0), (0, 0), (padding, padding), (padding, padding)))

    taps = []
    for ki in range(kh):
        for kj in range(kw):
            hi, wi = ki * dilation, kj * dilation
            taps.append(
                x_pad[:, :, hi:hi + stride * h_out:stride,
                      wi:wi + stride * w_out:stride])
    # (N, C_in, kh*kw, H_out, W_out) -> (N, K, HW): leading-axis permute with
    # contiguous H*W chunks.
    patches = jnp.stack(taps, axis=2).reshape(n, c_in * kh * kw, h_out * w_out)
    return patches, (h_out, w_out)


def relu_conv_bn(x, conv_w, gamma, beta, *, kernel_size, stride, padding,
                 dilation=1, eps=1e-5, compute_dtype=jnp.bfloat16,
                 max_tile_hw=8192):
    """x: (N, C_in, H, W) f32; conv_w: (C_out, C_in, kh, kw); gamma/beta: (C_out,)."""
    n = x.shape[0]
    c_out = conv_w.shape[0]
    c_in = conv_w.shape[1]
    k = c_in * kernel_size * kernel_size

    # LeakyReLU exactly once, in f32 (fused by XLA into the im2col gather).
    xr = jnp.where(x >= 0, x, jnp.float32(0.1) * x)
    patches, (h_out, w_out) = _im2col_kmajor(xr, kernel_size, stride, padding,
                                             dilation)
    hw = h_out * w_out

    # Spatial tiling: lane-dense (multiple of 128) tiles.  When N == 1, split
    # the spatial axis across a leading "parallel" axis so both v7x
    # TensorCores get work (per-core partial stats, reduced on host).
    n_par = 2 if (n == 1 and hw >= 256) else 1
    n_tiles = max(_cdiv(hw, max_tile_hw), n_par)
    n_tiles = _round_up(n_tiles, n_par)
    tile_hw = _round_up(_cdiv(hw, n_tiles), 128)
    hwp = n_tiles * tile_hw
    tiles_per_core = n_tiles // n_par

    if hwp != hw:
        # Padded patch columns are zero -> y there is exactly zero -> BN stats
        # are unaffected (we divide by the true count below).
        patches = jnp.pad(patches, ((0, 0), (0, 0), (0, hwp - hw)))
    patches = patches.astype(compute_dtype)
    w_mat = conv_w.reshape(c_out, k).astype(compute_dtype)

    y_dtype = compute_dtype            # bf16 intermediate on the fast path
    itemsize = jnp.dtype(compute_dtype).itemsize
    y_itemsize = jnp.dtype(y_dtype).itemsize
    vmem_limit = 32 * 1024 * 1024      # fits v5e/v6e/v7x

    cost1 = pl.CostEstimate(
        flops=2 * n * hwp * k * c_out,
        transcendentals=0,
        bytes_accessed=(n * k * hwp + c_out * k) * itemsize
        + n * c_out * hwp * y_itemsize + 2 * n_par * n * c_out * 4,
    )

    # --- Kernel 1: fused conv matmul + BN statistics -------------------------
    y, psum, psumsq = pl.pallas_call(
        conv_stats_kernel,
        out_shape=(
            jax.ShapeDtypeStruct((n, c_out, hwp), y_dtype),
            jax.ShapeDtypeStruct((n_par, n, c_out, 1), jnp.float32),
            jax.ShapeDtypeStruct((n_par, n, c_out, 1), jnp.float32),
        ),
        grid=(n_par, n, tiles_per_core),
        in_specs=[
            pl.BlockSpec((None, k, tile_hw),
                         lambda p, i, t: (i, 0, p * tiles_per_core + t)),
            pl.BlockSpec((c_out, k), lambda p, i, t: (0, 0)),
        ],
        out_specs=(
            pl.BlockSpec((None, c_out, tile_hw),
                         lambda p, i, t: (i, 0, p * tiles_per_core + t)),
            pl.BlockSpec((None, None, c_out, 1), lambda p, i, t: (p, i, 0, 0)),
            pl.BlockSpec((None, None, c_out, 1), lambda p, i, t: (p, i, 0, 0)),
        ),
        # Stats accumulate across the innermost spatial-tile axis ("arbitrary");
        # the core-split and batch axes are "parallel" (megacore).
        compiler_params=pltpu.CompilerParams(
            dimension_semantics=("parallel", "parallel", "arbitrary"),
            vmem_limit_bytes=vmem_limit,
        ),
        cost_estimate=cost1,
    )(patches, w_mat)

    # Fold BN into per-channel scale/shift on the host (tiny: n_par*N*C_out).
    count = jnp.float32(n * hw)        # true element count per channel
    tsum = jnp.sum(psum, axis=(0, 1))      # (C_out, 1)
    tsq = jnp.sum(psumsq, axis=(0, 1))     # (C_out, 1)
    mean = tsum / count
    # Biased variance (PyTorch BN forward) from sum/sumsq; clamp tiny negative
    # residue from f32 cancellation.
    # TODO(synk): switch to a shifted two-pass variance if feature maps get large.
    var = jnp.maximum(tsq / count - mean * mean, 0.0)
    inv = jax.lax.rsqrt(var + jnp.float32(eps))
    scale = gamma.reshape(c_out, 1).astype(jnp.float32) * inv
    shift = beta.reshape(c_out, 1).astype(jnp.float32) - mean * scale

    cost2 = pl.CostEstimate(
        flops=2 * n * hwp * c_out,
        transcendentals=0,
        bytes_accessed=n * c_out * (hwp * y_itemsize + hw * 4) + 2 * c_out * 4,
    )

    # --- Kernel 2: streaming BN apply, both axes parallel ---------------------
    # Output has the true hw extent: the last (partial) tile's store is masked
    # by Pallas, so no extra XLA slice pass over the output.
    out = pl.pallas_call(
        bn_apply_kernel,
        out_shape=jax.ShapeDtypeStruct((n, c_out, hw), jnp.float32),
        grid=(n, n_tiles),
        in_specs=[
            pl.BlockSpec((None, c_out, tile_hw), lambda i, t: (i, 0, t)),
            pl.BlockSpec((c_out, 1), lambda i, t: (0, 0)),
            pl.BlockSpec((c_out, 1), lambda i, t: (0, 0)),
        ],
        out_specs=pl.BlockSpec((None, c_out, tile_hw), lambda i, t: (i, 0, t)),
        compiler_params=pltpu.CompilerParams(
            dimension_semantics=("parallel", "parallel"),
            vmem_limit_bytes=vmem_limit,
        ),
        cost_estimate=cost2,
    )(y, scale, shift)

    # Output is already (N, C_out, HW): NCHW is a free reshape (no transpose).
    return out.reshape(n, c_out, h_out, w_out)


# -----------------------------------------------------------------------------
# Pure-JAX reference for the correctness check
# -----------------------------------------------------------------------------
def reference(x, conv_w, gamma, beta, *, kernel_size, stride, padding,
              dilation=1, eps=1e-5):
    a = jnp.where(x >= 0, x, 0.1 * x)
    y = jax.lax.conv_general_dilated(
        a, conv_w,
        window_strides=(stride, stride),
        padding=((padding, padding), (padding, padding)),
        rhs_dilation=(dilation, dilation),
        dimension_numbers=("NCHW", "OIHW", "NCHW"),
    )
    mean = jnp.mean(y, axis=(0, 2, 3), keepdims=True)
    var = jnp.mean((y - mean) ** 2, axis=(0, 2, 3), keepdims=True)
    return (y - mean) * jax.lax.rsqrt(var + eps) * gamma.reshape(1, -1, 1, 1) \
        + beta.reshape(1, -1, 1, 1)


if __name__ == "__main__":
    # ReLUConvBN(C_in=4, C_out=8, kernel_size=3, stride=1, padding=1)
    C_in, C_out, ksize, stride, padding, dilation = 4, 8, 3, 1, 1, 1

    key = jax.random.PRNGKey(0)
    kx, kwt, kg, kb = jax.random.split(key, 4)
    conv_w = jax.random.normal(kwt, (C_out, C_in, ksize, ksize),
                               dtype=jnp.float32) * 0.1
    gamma = 1.0 + 0.1 * jax.random.normal(kg, (C_out,), dtype=jnp.float32)
    beta = 0.1 * jax.random.normal(kb, (C_out,), dtype=jnp.float32)

    fwd_f32 = jax.jit(functools.partial(
        relu_conv_bn, kernel_size=ksize, stride=stride, padding=padding,
        dilation=dilation, compute_dtype=jnp.float32))
    fwd_bf16 = jax.jit(functools.partial(
        relu_conv_bn, kernel_size=ksize, stride=stride, padding=padding,
        dilation=dilation, compute_dtype=jnp.bfloat16))

    # Case 1: N=2, 16x16 (lane-aligned spatial).  f32 strict + bf16 fast path.
    x1 = jax.random.normal(kx, (2, C_in, 16, 16), dtype=jnp.float32)
    ref1 = reference(x1, conv_w, gamma, beta, kernel_size=ksize, stride=stride,
                     padding=padding, dilation=dilation)
    out1 = jax.block_until_ready(fwd_f32(x1, conv_w, gamma, beta))
    assert out1.shape == (2, C_out, 16, 16)
    assert jnp.allclose(out1, ref1, atol=1e-3, rtol=1e-3), "f32 mismatch (case 1)"
    out1b = jax.block_until_ready(fwd_bf16(x1, conv_w, gamma, beta))
    assert jnp.allclose(out1b, ref1, atol=3e-2, rtol=3e-2), "bf16 mismatch (case 1)"

    # Case 2: N=1, 20x20 -> exercises the v7x spatial core split (n_par=2) and
    # the masked partial final tile (hw=400 not a multiple of 128).
    x2 = jax.random.normal(jax.random.PRNGKey(1), (1, C_in, 20, 20),
                           dtype=jnp.float32)
    ref2 = reference(x2, conv_w, gamma, beta, kernel_size=ksize, stride=stride,
                     padding=padding, dilation=dilation)
    out2 = jax.block_until_ready(fwd_f32(x2, conv_w, gamma, beta))
    assert out2.shape == (1, C_out, 20, 20)
    assert jnp.allclose(out2, ref2, atol=1e-3, rtol=1e-3), "f32 mismatch (case 2)"

    print("KERNEL_OK")
</pallas_src>

<mosaic_0001>
module attributes {stable_mosaic.version = 11 : i64} {
  func.func @conv_stats_kernel(%arg0: i32, %arg1: i32, %arg2: i32, %arg3: memref<1x36x256xf32, #tpu.memory_space<vmem>>, %arg4: memref<8x36xf32, #tpu.memory_space<vmem>>, %arg5: memref<1x8x256xf32, #tpu.memory_space<vmem>>, %arg6: memref<1x1x8x1xf32, #tpu.memory_space<vmem>>, %arg7: memref<1x1x8x1xf32, #tpu.memory_space<vmem>>) attributes {dimension_semantics = [#tpu.dimension_semantics<parallel>, #tpu.dimension_semantics<parallel>, #tpu.dimension_semantics<arbitrary>], iteration_bounds = array<i64: 1, 2, 1>, scalar_prefetch = 0 : i64, scratch_operands = 0 : i64, tpu.core_type = #tpu.core_type<tc>, window_params = [{transform_indices = @transform_0, window_bounds = array<i64: 1, 36, 256>}, {pipeline_mode = #tpu.pipeline_mode<synchronous>, transform_indices = @transform_1, window_bounds = array<i64: 8, 36>}, {transform_indices = @transform_2, window_bounds = array<i64: 1, 8, 256>}, {transform_indices = @transform_3, window_bounds = array<i64: 1, 1, 8, 1>}, {transform_indices = @transform_4, window_bounds = array<i64: 1, 1, 8, 1>}]} {
    %c0 = arith.constant 0 : index
    %c0_0 = arith.constant 0 : index
    %c0_1 = arith.constant 0 : index
    %0 = vector.load %arg3[%c0, %c0_0, %c0_1] : memref<1x36x256xf32, #tpu.memory_space<vmem>>, vector<1x36x256xf32>
    %1 = vector.shape_cast %0 : vector<1x36x256xf32> to vector<36x256xf32>
    %c0_2 = arith.constant 0 : index
    %c0_3 = arith.constant 0 : index
    %2 = vector.load %arg4[%c0_2, %c0_3] : memref<8x36xf32, #tpu.memory_space<vmem>>, vector<8x36xf32>
    %cst = arith.constant dense<0.000000e+00> : vector<8x256xf32>
    %3 = tpu.matmul %2, %1, %cst {dimension_numbers = #tpu.dot_dimension_numbers<[1], [0], [0], [1], [0, 0, 1, 1], [], []>} : vector<8x36xf32>, vector<36x256xf32>, vector<8x256xf32> -> vector<8x256xf32>
    %c0_4 = arith.constant 0 : index
    %c0_5 = arith.constant 0 : index
    %c0_6 = arith.constant 0 : index
    %4 = vector.load %arg5[%c0_4, %c0_5, %c0_6] : memref<1x8x256xf32, #tpu.memory_space<vmem>>, vector<1x8x256xf32>
    %5 = vector.shape_cast %4 : vector<1x8x256xf32> to vector<8x256xf32>
    %6 = vector.shape_cast %3 : vector<8x256xf32> to vector<1x8x256xf32>
    tpu.vector_store %arg5[%c0_4, %c0_5, %c0_6], %6 {strides = array<i32>} : memref<1x8x256xf32, #tpu.memory_space<vmem>>, vector<1x8x256xf32>,
    %c0_i32 = arith.constant 0 : i32
    %7 = arith.cmpi eq, %arg2, %c0_i32 : i32
    %8 = arith.extui %7 : i1 to i32
    %c0_i32_7 = arith.constant 0 : i32
    %9 = arith.cmpi ne, %8, %c0_i32_7 : i32
    scf.if %9 {
      %cst_26 = arith.constant 0.000000e+00 : f32
      %27 = vector.broadcast %cst_26 : f32 to vector<8x1xf32>
      %c0_27 = arith.constant 0 : index
      %c0_28 = arith.constant 0 : index
      %c0_29 = arith.constant 0 : index
      %c0_30 = arith.constant 0 : index
      %28 = vector.load %arg6[%c0_27, %c0_28, %c0_29, %c0_30] : memref<1x1x8x1xf32, #tpu.memory_space<vmem>>, vector<1x1x8x1xf32>
      %29 = vector.shape_cast %28 : vector<1x1x8x1xf32> to vector<8x1xf32>
      %30 = vector.shape_cast %27 : vector<8x1xf32> to vector<1x1x8x1xf32>
      tpu.vector_store %arg6[%c0_27, %c0_28, %c0_29, %c0_30], %30 {strides = array<i32>} : memref<1x1x8x1xf32, #tpu.memory_space<vmem>>, vector<1x1x8x1xf32>,
      %cst_31 = arith.constant 0.000000e+00 : f32
      %31 = vector.broadcast %cst_31 : f32 to vector<8x1xf32>
      %c0_32 = arith.constant 0 : index
      %c0_33 = arith.constant 0 : index
      %c0_34 = arith.constant 0 : index
      %c0_35 = arith.constant 0 : index
      %32 = vector.load %arg7[%c0_32, %c0_33, %c0_34, %c0_35] : memref<1x1x8x1xf32, #tpu.memory_space<vmem>>, vector<1x1x8x1xf32>
      %33 = vector.shape_cast %32 : vector<1x1x8x1xf32> to vector<8x1xf32>
      %34 = vector.shape_cast %31 : vector<8x1xf32> to vector<1x1x8x1xf32>
      tpu.vector_store %arg7[%c0_32, %c0_33, %c0_34, %c0_35], %34 {strides = array<i32>} : memref<1x1x8x1xf32, #tpu.memory_space<vmem>>, vector<1x1x8x1xf32>,
    } else {
    }
    %c0_8 = arith.constant 0 : index
    %c0_9 = arith.constant 0 : index
    %c0_10 = arith.constant 0 : index
    %c0_11 = arith.constant 0 : index
    %10 = vector.load %arg6[%c0_8, %c0_9, %c0_10, %c0_11] : memref<1x1x8x1xf32, #tpu.memory_space<vmem>>, vector<1x1x8x1xf32>
    %11 = vector.shape_cast %10 : vector<1x1x8x1xf32> to vector<8x1xf32>
    %cst_12 = arith.constant dense<0.000000e+00> : vector<8xf32>
    %12 = vector.multi_reduction <add>, %3, %cst_12 [1] : vector<8x256xf32> to vector<8xf32>
    %13 = vector.shape_cast %12 : vector<8xf32> to vector<8x1xf32>
    %14 = arith.addf %11, %13 : vector<8x1xf32>
    %c0_13 = arith.constant 0 : index
    %c0_14 = arith.constant 0 : index
    %c0_15 = arith.constant 0 : index
    %c0_16 = arith.constant 0 : index
    %15 = vector.load %arg6[%c0_13, %c0_14, %c0_15, %c0_16] : memref<1x1x8x1xf32, #tpu.memory_space<vmem>>, vector<1x1x8x1xf32>
    %16 = vector.shape_cast %15 : vector<1x1x8x1xf32> to vector<8x1xf32>
    %17 = vector.shape_cast %14 : vector<8x1xf32> to vector<1x1x8x1xf32>
    tpu.vector_store %arg6[%c0_13, %c0_14, %c0_15, %c0_16], %17 {strides = array<i32>} : memref<1x1x8x1xf32, #tpu.memory_space<vmem>>, vector<1x1x8x1xf32>,
    %c0_17 = arith.constant 0 : index
    %c0_18 = arith.constant 0 : index
    %c0_19 = arith.constant 0 : index
    %c0_20 = arith.constant 0 : index
    %18 = vector.load %arg7[%c0_17, %c0_18, %c0_19, %c0_20] : memref<1x1x8x1xf32, #tpu.memory_space<vmem>>, vector<1x1x8x1xf32>
    %19 = vector.shape_cast %18 : vector<1x1x8x1xf32> to vector<8x1xf32>
    %20 = arith.mulf %3, %3 : vector<8x256xf32>
    %cst_21 = arith.constant dense<0.000000e+00> : vector<8xf32>
    %21 = vector.multi_reduction <add>, %20, %cst_21 [1] : vector<8x256xf32> to vector<8xf32>
    %22 = vector.shape_cast %21 : vector<8xf32> to vector<8x1xf32>
    %23 = arith.addf %19, %22 : vector<8x1xf32>
    %c0_22 = arith.constant 0 : index
    %c0_23 = arith.constant 0 : index
    %c0_24 = arith.constant 0 : index
    %c0_25 = arith.constant 0 : index
    %24 = vector.load %arg7[%c0_22, %c0_23, %c0_24, %c0_25] : memref<1x1x8x1xf32, #tpu.memory_space<vmem>>, vector<1x1x8x1xf32>
    %25 = vector.shape_cast %24 : vector<1x1x8x1xf32> to vector<8x1xf32>
    %26 = vector.shape_cast %23 : vector<8x1xf32> to vector<1x1x8x1xf32>
    tpu.vector_store %arg7[%c0_22, %c0_23, %c0_24, %c0_25], %26 {strides = array<i32>} : memref<1x1x8x1xf32, #tpu.memory_space<vmem>>, vector<1x1x8x1xf32>,
    return
  }
  func.func @transform_0(%arg0: i32, %arg1: i32, %arg2: i32) -> (i32, i32, i32) {
    %c1_i32 = arith.constant 1 : i32
    %0 = arith.muli %arg0, %c1_i32 : i32
    %1 = arith.addi %0, %arg2 : i32
    %c0_i32 = arith.constant 0 : i32
    %c0_i32_0 = arith.constant 0 : i32
    return %arg1, %c0_i32, %1 : i32, i32, i32
  }
  func.func @transform_1(%arg0: i32, %arg1: i32, %arg2: i32) -> (i32, i32) {
    %c0_i32 = arith.constant 0 : i32
    %c0_i32_0 = arith.constant 0 : i32
    %c0_i32_1 = arith.constant 0 : i32
    return %c0_i32, %c0_i32_0 : i32, i32
  }
  func.func @transform_2(%arg0: i32, %arg1: i32, %arg2: i32) -> (i32, i32, i32) {
    %c1_i32 = arith.constant 1 : i32
    %0 = arith.muli %arg0, %c1_i32 : i32
    %1 = arith.addi %0, %arg2 : i32
    %c0_i32 = arith.constant 0 : i32
    %c0_i32_0 = arith.constant 0 : i32
    return %arg1, %c0_i32, %1 : i32, i32, i32
  }
  func.func @transform_3(%arg0: i32, %arg1: i32, %arg2: i32) -> (i32, i32, i32, i32) {
    %c0_i32 = arith.constant 0 : i32
    %c0_i32_0 = arith.constant 0 : i32
    %c0_i32_1 = arith.constant 0 : i32
    return %arg0, %arg1, %c0_i32, %c0_i32_0 : i32, i32, i32, i32
  }
  func.func @transform_4(%arg0: i32, %arg1: i32, %arg2: i32) -> (i32, i32, i32, i32) {
    %c0_i32 = arith.constant 0 : i32
    %c0_i32_0 = arith.constant 0 : i32
    %c0_i32_1 = arith.constant 0 : i32
    return %arg0, %arg1, %c0_i32, %c0_i32_0 : i32, i32, i32, i32
  }
}

module attributes {stable_mosaic.version = 11 : i64} {
  func.func @bn_apply_kernel(%arg0: i32, %arg1: i32, %arg2: memref<1x8x256xf32, #tpu.memory_space<vmem>>, %arg3: memref<8x1xf32, #tpu.memory_space<vmem>>, %arg4: memref<8x1xf32, #tpu.memory_space<vmem>>, %arg5: memref<1x8x256xf32, #tpu.memory_space<vmem>>) attributes {dimension_semantics = [#tpu.dimension_semantics<parallel>, #tpu.dimension_semantics<parallel>], iteration_bounds = array<i64: 2, 1>, scalar_prefetch = 0 : i64, scratch_operands = 0 : i64, tpu.core_type = #tpu.core_type<tc>, window_params = [{transform_indices = @transform_0, window_bounds = array<i64: 1, 8, 256>}, {pipeline_mode = #tpu.pipeline_mode<synchronous>, transform_indices = @transform_1, window_bounds = array<i64: 8, 1>}, {pipeline_mode = #tpu.pipeline_mode<synchronous>, transform_indices = @transform_2, window_bounds = array<i64: 8, 1>}, {transform_indices = @transform_3, window_bounds = array<i64: 1, 8, 256>}]} {
    %c0 = arith.constant 0 : index
    %c0_0 = arith.constant 0 : index
    %c0_1 = arith.constant 0 : index
    %0 = vector.load %arg2[%c0, %c0_0, %c0_1] : memref<1x8x256xf32, #tpu.memory_space<vmem>>, vector<1x8x256xf32>
    %1 = vector.shape_cast %0 : vector<1x8x256xf32> to vector<8x256xf32>
    %c0_2 = arith.constant 0 : index
    %c0_3 = arith.constant 0 : index
    %2 = vector.load %arg3[%c0_2, %c0_3] : memref<8x1xf32, #tpu.memory_space<vmem>>, vector<8x1xf32>
    %3 = vector.broadcast %2 : vector<8x1xf32> to vector<8x256xf32>
    %4 = arith.mulf %1, %3 : vector<8x256xf32>
    %c0_4 = arith.constant 0 : index
    %c0_5 = arith.constant 0 : index
    %5 = vector.load %arg4[%c0_4, %c0_5] : memref<8x1xf32, #tpu.memory_space<vmem>>, vector<8x1xf32>
    %6 = vector.broadcast %5 : vector<8x1xf32> to vector<8x256xf32>
    %7 = arith.addf %4, %6 : vector<8x256xf32>
    %c0_6 = arith.constant 0 : index
    %c0_7 = arith.constant 0 : index
    %c0_8 = arith.constant 0 : index
    %8 = vector.load %arg5[%c0_6, %c0_7, %c0_8] : memref<1x8x256xf32, #tpu.memory_space<vmem>>, vector<1x8x256xf32>
    %9 = vector.shape_cast %8 : vector<1x8x256xf32> to vector<8x256xf32>
    %10 = vector.shape_cast %7 : vector<8x256xf32> to vector<1x8x256xf32>
    tpu.vector_store %arg5[%c0_6, %c0_7, %c0_8], %10 {strides = array<i32>} : memref<1x8x256xf32, #tpu.memory_space<vmem>>, vector<1x8x256xf32>,
    return
  }
  func.func @transform_0(%arg0: i32, %arg1: i32) -> (i32, i32, i32) {
    %c0_i32 = arith.constant 0 : i32
    %c0_i32_0 = arith.constant 0 : i32
    return %arg0, %c0_i32, %arg1 : i32, i32, i32
  }
  func.func @transform_1(%arg0: i32, %arg1: i32) -> (i32, i32) {
    %c0_i32 = arith.constant 0 : i32
    %c0_i32_0 = arith.constant 0 : i32
    %c0_i32_1 = arith.constant 0 : i32
    return %c0_i32, %c0_i32_0 : i32, i32
  }
  func.func @transform_2(%arg0: i32, %arg1: i32) -> (i32, i32) {
    %c0_i32 = arith.constant 0 : i32
    %c0_i32_0 = arith.constant 0 : i32
    %c0_i32_1 = arith.constant 0 : i32
    return %c0_i32, %c0_i32_0 : i32, i32
  }
  func.func @transform_3(%arg0: i32, %arg1: i32) -> (i32, i32, i32) {
    %c0_i32 = arith.constant 0 : i32
    %c0_i32_0 = arith.constant 0 : i32
    return %arg0, %c0_i32, %arg1 : i32, i32, i32
  }
}

</mosaic_0001>

<llo_original>
// kernel: relu_conv_bn.3
$region0: #{relu_conv_bn.3}
  #allocation0 [shape = 'u32[]', space=smem, size = 0x4, offset = 0x4, fixed_abs, tag = 'smem constant byte address 0x4 - core index']
  #allocation1 [shape = 'u32[144,128]{1,0:T(1,128)}', space=vmem, size = 0x12000, scoped, tag = 'internal scratch']
  %s0 = inlined_call_operand.vmem [shape: f32[2,8,256], index: 0, kind: input, shape index: {}]
  %s1 = inlined_call_operand.vmem [shape: f32[8,1], index: 1, kind: input, shape index: {}]
  %s2 = inlined_call_operand.vmem [shape: f32[8,1], index: 2, kind: input, shape index: {}]
  %s3 = inlined_call_operand.vmem [shape: f32[2,8,256], index: 3, kind: output, shape index: {}]
  %s4 = sld [smem:[#allocation0]]
  $region45: #{relu_conv_bn.3} parent=0
    _
  %s6 = ssub.s32 1, %s4
  %s7 = scalar_select 0, %s6, %s4
  loop: start=0, step=1, limit=4
  $region2: #{relu_conv_bn.3} parent=0 // loop_pre_header
    _
  $region3: #{relu_conv_bn.3} parent=0 // loop_header
    %s9 = sphi 0, %s13
    %p10 = scmp.ge.s32.totalorder %s9, 4
    %s16 = sphi 0, %s28
    %s17 = sphi 0, %s24
    %s18 = sphi 0, %s16
    %s19 = sphi 0, %s17
    %s20 = sphi 0, %s18
    %s21 = sphi 0, %s19
    %s33 = sphi 0, %s35
    %s36 = sphi 0, %s33
    %s37 = sphi 0, %s36
    %s53 = sphi 0, %s37
    %s57 = sphi 0, %s57
    %s59 = sphi 0, %s57
    %s60 = sphi 0, %s59
    %s74 = sphi 0, %s60
    %s78 = sphi 0, %s78
    %s80 = sphi 0, %s78
    %s81 = sphi 0, %s80
    %s95 = sphi 0, %s81
    %s103 = sphi 0, %s105
    %s106 = sphi 0, %s103
    %s107 = sphi 0, %s106
    %s123 = sphi 0, %s107
  $region4: #{relu_conv_bn.3} parent=0 // loop_header_branch
    %12 = sbr.rel (%p10) target = $region8
  $region5: #{relu_conv_bn.3} parent=0 // loop_body
    %s14 = ssub.s32 %s9, 1
    %s15 = ssub.s32 %s9, 2
    %s22 = sadd.s32 1, %s17
    %p23 = scmp.ge.s32.totalorder %s22, 1
    %s24 = scalar_select %p23, 0, %s22
    %s25 = sadd.s32 1, %s16
    %s26 = scalar_select %p23, %s25, %s16
    %p27 = scmp.ge.s32.totalorder %s26, 2
    %s28 = scalar_select %p27, 0, %s26
    %s29 = ssub.s32 %s16, %s28
    %s30 = ssub.s32 %s17, %s24
    %s31 = sor.u32 %s29, %s30
    %p32 = scmp.eq.s32.totalorder %s31, 0
    %s34 = sadd.s32 %s33, 1
    %s35 = scalar_select %p32, %s33, %s34
    %p38 = pneg %p32
    %p39 = scmp.eq.s32.totalorder %s9, 1
    %p40 = por %p38, %p39
    %p41 = scmp.ne.s32.totalorder %s33, %s36
    %p42 = scmp.eq.s32.totalorder %s9, 0
    %p43 = por %p41, %p42
    %p44 = scmp.ne.s32.totalorder %s33, %s36
    %p45 = scmp.eq.s32.totalorder %s14, 1
    %p46 = por %p44, %p45
    %p47 = scmp.ne.s32.totalorder %s36, %s37
    %p48 = scmp.eq.s32.totalorder %s14, 0
    %p49 = por %p47, %p48
    %p50 = scmp.ne.s32.totalorder %s36, %s37
    %p51 = scmp.eq.s32.totalorder %s15, 1
    %p52 = por %p50, %p51
    %p54 = scmp.ne.s32.totalorder %s37, %s53
    %p55 = scmp.eq.s32.totalorder %s15, 0
    %p56 = por %p54, %p55
    %s58 = sadd.s32 %s57, 1
    %p61 = scmp.eq.s32.totalorder %s9, 1
    %p62 = scmp.ne.s32.totalorder %s57, %s59
    %p63 = scmp.eq.s32.totalorder %s9, 0
    %p64 = por %p62, %p63
    %p65 = scmp.ne.s32.totalorder %s57, %s59
    %p66 = scmp.eq.s32.totalorder %s14, 1
    %p67 = por %p65, %p66
    %p68 = scmp.ne.s32.totalorder %s59, %s60
    %p69 = scmp.eq.s32.totalorder %s14, 0
    %p70 = por %p68, %p69
    %p71 = scmp.ne.s32.totalorder %s59, %s60
    %p72 = scmp.eq.s32.totalorder %s15, 1
    %p73 = por %p71, %p72
    %p75 = scmp.ne.s32.totalorder %s60, %s74
    %p76 = scmp.eq.s32.totalorder %s15, 0
    %p77 = por %p75, %p76
    %s79 = sadd.s32 %s78, 1
    %p82 = scmp.eq.s32.totalorder %s9, 1
    %p83 = scmp.ne.s32.totalorder %s78, %s80
    %p84 = scmp.eq.s32.totalorder %s9, 0
    %p85 = por %p83, %p84
    %p86 = scmp.ne.s32.totalorder %s78, %s80
    %p87 = scmp.eq.s32.totalorder %s14, 1
    %p88 = por %p86, %p87
    %p89 = scmp.ne.s32.totalorder %s80, %s81
    %p90 = scmp.eq.s32.totalorder %s14, 0
    %p91 = por %p89, %p90
    %p92 = scmp.ne.s32.totalorder %s80, %s81
    %p93 = scmp.eq.s32.totalorder %s15, 1
    %p94 = por %p92, %p93
    %p96 = scmp.ne.s32.totalorder %s81, %s95
    %p97 = scmp.eq.s32.totalorder %s15, 0
    %p98 = por %p96, %p97
    %s99 = ssub.s32 %s16, %s28
    %s100 = ssub.s32 %s17, %s24
    %s101 = sor.u32 %s99, %s100
    %p102 = scmp.eq.s32.totalorder %s101, 0
    %s104 = sadd.s32 %s103, 1
    %s105 = scalar_select %p102, %s103, %s104
    %p108 = pneg %p102
    %p109 = scmp.eq.s32.totalorder %s9, 1
    %p110 = por %p108, %p109
    %p111 = scmp.ne.s32.totalorder %s103, %s106
    %p112 = scmp.eq.s32.totalorder %s9, 0
    %p113 = por %p111, %p112
    %p114 = scmp.ne.s32.totalorder %s103, %s106
    %p115 = scmp.eq.s32.totalorder %s14, 1
    %p116 = por %p114, %p115
    %p117 = scmp.ne.s32.totalorder %s106, %s107
    %p118 = scmp.eq.s32.totalorder %s14, 0
    %p119 = por %p117, %p118
    %p120 = scmp.ne.s32.totalorder %s106, %s107
    %p121 = scmp.eq.s32.totalorder %s15, 1
    %p122 = por %p120, %p121
    %p124 = scmp.ne.s32.totalorder %s107, %s123
    %p125 = scmp.eq.s32.totalorder %s15, 0
    %p126 = por %p124, %p125
    %p127 = scmp.le.s32.totalorder 1, %s9
    %p128 = scmp.lt.s32.totalorder %s9, 3
    %p129 = pnand %p127, %p128
    %p130 = pneg %p129
    // Predicated region
    $region9: #{relu_conv_bn.3} parent=5 // pred_check
      _
    $region10: #{relu_conv_bn.3} parent=5 // pred_check_branch
      %132 = sbr.rel (%p129) target = $region12
    $region11: #{relu_conv_bn.3} parent=5 // pred_region
      %s133 = ssub.s32 %s9, 1
      // Predicated region
      $region13: #{relu_conv_bn.3} parent=11 // pred_check
        %p134 = pneg %p70
      $region14: #{relu_conv_bn.3} parent=11 // pred_check_branch
        %136 = sbr.rel (%p134) target = $region16
      $region15: #{relu_conv_bn.3} parent=11 // pred_region
        _
      $region16: #{relu_conv_bn.3} parent=11 // pred_fallthru
        _
      // Predicated region
      $region17: #{relu_conv_bn.3} parent=11 // pred_check
        %p137 = pneg %p91
      $region18: #{relu_conv_bn.3} parent=11 // pred_check_branch
        %139 = sbr.rel (%p137) target = $region20
      $region19: #{relu_conv_bn.3} parent=11 // pred_region
        _
      $region20: #{relu_conv_bn.3} parent=11 // pred_fallthru
        _
    $region12: #{relu_conv_bn.3} parent=5 // pred_fallthru
      _
    %p140 = scmp.lt.s32.totalorder %s9, 2
    // Predicated region
    $region21: #{relu_conv_bn.3} parent=5 // pred_check
      %p141 = pneg %p140
    $region22: #{relu_conv_bn.3} parent=5 // pred_check_branch
      %143 = sbr.rel (%p141) target = $region24
    $region23: #{relu_conv_bn.3} parent=5 // pred_region
      // Predicated region
      $region25: #{relu_conv_bn.3} parent=23 // pred_check
        %p144 = pneg %p43
      $region26: #{relu_conv_bn.3} parent=23 // pred_check_branch
        %146 = sbr.rel (%p144) target = $region28
      $region27: #{relu_conv_bn.3} parent=23 // pred_region
        %s147 = smul.u32 2, %s17
        %p148 = scmp.lt.s32.totalorder %s16, 1
        %s149 = scalar_select %p148, %s16, 1
        %p150 = scmp.lt.s32.totalorder %s147, 1
        %s151 = scalar_select %p150, %s147, 1
        %s152 = smul.addr %s149, 2
        %s153 = sadd.s32 %s151, %s152
        %s154 = smul.addr %s153, 8
        %s155 = scalar_lea.vmem %s0, %s154
        %s156 = smul.u32 2, %s17
      $region28: #{relu_conv_bn.3} parent=23 // pred_fallthru
        _
    $region24: #{relu_conv_bn.3} parent=5 // pred_fallthru
      _
    %p157 = scmp.le.s32.totalorder 1, %s9
    %p158 = scmp.lt.s32.totalorder %s9, 3
    %p159 = pnand %p157, %p158
    %p160 = pneg %p159
    // Predicated region
    $region29: #{relu_conv_bn.3} parent=5 // pred_check
      _
    $region30: #{relu_conv_bn.3} parent=5 // pred_check_branch
      %162 = sbr.rel (%p159) target = $region32
    $region31: #{relu_conv_bn.3} parent=5 // pred_region
      %s163 = ssub.s32 %s9, 1
      %s164 = smul.u32 2, %s19
      %p165 = scmp.lt.s32.totalorder %s18, 1
      %s166 = scalar_select %p165, %s18, 1
      %p167 = scmp.lt.s32.totalorder %s164, 1
      %s168 = scalar_select %p167, %s164, 1
      %s169 = smul.addr %s166, 2
      %s170 = sadd.s32 %s168, %s169
      %s171 = smul.addr %s170, 8
      %s172 = scalar_lea.vmem %s0, %s171
      %p173 = pneg %p49
      %p174 = pneg %p46
      %p175 = pneg %p70
      %p176 = pneg %p67
      %p177 = pneg %p91
      %p178 = pneg %p88
      %p179 = pneg %p119
      %p180 = pneg %p116
      %s181 = smul.u32 2, %s19
      %p182 = scmp.lt.s32.totalorder %s18, 1
      %s183 = scalar_select %p182, %s18, 1
      %p184 = scmp.lt.s32.totalorder %s181, 1
      %s185 = scalar_select %p184, %s181, 1
      %s186 = smul.addr %s183, 2
      %s187 = sadd.s32 %s185, %s186
      %s188 = smul.addr %s187, 8
      %s189 = scalar_lea.vmem %s3, %s188
      %s190 = smul.u32 2, %s19
      %p191 = scmp.lt.s32.totalorder %s18, 1
      %s192 = scalar_select %p191, %s18, 1
      %p193 = scmp.lt.s32.totalorder %s190, 1
      %s194 = scalar_select %p193, %s190, 1
      %s195 = smul.addr %s192, 2
      %s196 = sadd.s32 %s194, %s195
      %s197 = smul.addr %s196, 8
      %s198 = scalar_lea.vmem %s0, %s197
      %s199 = smul.u32 2, %s19
      %s200 = smul.u32 2, %s19
      %p201 = scmp.lt.s32.totalorder %s18, 1
      %s202 = scalar_select %p201, %s18, 1
      %p203 = scmp.lt.s32.totalorder %s200, 1
      %s204 = scalar_select %p203, %s200, 1
      %s205 = smul.addr %s202, 2
      %s206 = sadd.s32 %s204, %s205
      %s207 = smul.addr %s206, 8
      %s208 = scalar_lea.vmem %s3, %s207
      %s209 = smul.u32 2, %s19
      %v210 = vld [vmem:[%s198] sm:$0xff]
      %v211 = vld [vmem:[%s198 + $0x8] sm:$0xff]
      %v212 = vld [vmem:[%s1] sm:$0xff]
      %214 = vset.pattern.permute.xlu0 0
      %215 = vperm.xlu0 %214, %v212
      %v216 = vpop.permute.xlu0 %215
      %v218 = vmul.f32 %v210, %v216
      %v219 = vmul.f32 %v211, %v216
      %v220 = vld [vmem:[%s2] sm:$0xff]
      %222 = vset.pattern.permute.xlu0 0
      %223 = vperm.xlu0 %222, %v220
      %v224 = vpop.permute.xlu0 %223
      %v226 = vadd.f32 %v218, %v224
      %v227 = vadd.f32 %v219, %v224
      %228 = vst [vmem:[%s208] sm:$0xff] %v226
      %229 = vst [vmem:[%s208 + $0x8] sm:$0xff] %v227
      %s230 = smul.u32 2, %s19
      %p231 = scmp.lt.s32.totalorder %s18, 1
      %s232 = scalar_select %p231, %s18, 1
      %p233 = scmp.lt.s32.totalorder %s230, 1
      %s234 = scalar_select %p233, %s230, 1
      %s235 = smul.addr %s232, 2
      %s236 = sadd.s32 %s234, %s235
      %s237 = smul.addr %s236, 8
      %s238 = scalar_lea.vmem %s3, %s237
      // Predicated region
      $region33: #{relu_conv_bn.3} parent=31 // pred_check
        %p239 = pneg %p116
      $region34: #{relu_conv_bn.3} parent=31 // pred_check_branch
        %241 = sbr.rel (%p239) target = $region36
      $region35: #{relu_conv_bn.3} parent=31 // pred_region
        %s242 = smul.u32 2, %s19
      $region36: #{relu_conv_bn.3} parent=31 // pred_fallthru
        _
    $region32: #{relu_conv_bn.3} parent=5 // pred_fallthru
      _
    %p243 = scmp.le.s32.totalorder 2, %s9
    // Predicated region
    $region37: #{relu_conv_bn.3} parent=5 // pred_check
      %p244 = pneg %p243
    $region38: #{relu_conv_bn.3} parent=5 // pred_check_branch
      %246 = sbr.rel (%p244) target = $region40
    $region39: #{relu_conv_bn.3} parent=5 // pred_region
      %s247 = ssub.s32 %s9, 2
      // Predicated region
      $region41: #{relu_conv_bn.3} parent=39 // pred_check
        %p248 = pneg %p122
      $region42: #{relu_conv_bn.3} parent=39 // pred_check_branch
        %250 = sbr.rel (%p248) target = $region44
      $region43: #{relu_conv_bn.3} parent=39 // pred_region
        %s251 = smul.u32 2, %s21
        %p252 = scmp.lt.s32.totalorder %s20, 1
        %s253 = scalar_select %p252, %s20, 1
        %p254 = scmp.lt.s32.totalorder %s251, 1
        %s255 = scalar_select %p254, %s251, 1
        %s256 = smul.addr %s253, 2
        %s257 = sadd.s32 %s255, %s256
        %s258 = smul.addr %s257, 8
        %s259 = scalar_lea.vmem %s3, %s258
      $region44: #{relu_conv_bn.3} parent=39 // pred_fallthru
        _
    $region40: #{relu_conv_bn.3} parent=5 // pred_fallthru
      _
  $region6: #{relu_conv_bn.3} parent=0 // loop_footer
    %s13 = sadd.s32 1, %s9
  $region7: #{relu_conv_bn.3} parent=0 // loop_footer_branch
    %8 = sbr.rel target = $region3
  $region8: #{relu_conv_bn.3} parent=0 // loop_exit
    _

// kernel: relu_conv_bn.2
$region0: #{relu_conv_bn.2}
  #allocation0 [shape = 'u32[]', space=smem, size = 0x4, offset = 0x4, fixed_abs, tag = 'smem constant byte address 0x4 - core index']
  #allocation1 [shape = 'u32[144,128]{1,0:T(1,128)}', space=vmem, size = 0x12000, scoped, tag = 'internal scratch']
  %s0 = inlined_call_operand.vmem [shape: f32[2,36,256], index: 0, kind: input, shape index: {}]
  %s1 = inlined_call_operand.vmem [shape: f32[8,36], index: 1, kind: input, shape index: {}]
  %s2 = inlined_call_operand.vmem [shape: f32[2,8,256], index: 2, kind: output, shape index: {0}]
  %s3 = inlined_call_operand.vmem [shape: f32[1,2,8,1], index: 3, kind: output, shape index: {1}]
  %s4 = inlined_call_operand.vmem [shape: f32[1,2,8,1], index: 4, kind: output, shape index: {2}]
  %5 = xla_tuple %s2, %s3, %s4
  %s6 = sld [smem:[#allocation0]]
  $region61: #{relu_conv_bn.2} parent=0
    _
  %s8 = ssub.s32 1, %s6
  %s9 = scalar_select 0, %s8, %s6
  loop: start=0, step=1, limit=4
  $region2: #{relu_conv_bn.2} parent=0 // loop_pre_header
    _
  $region3: #{relu_conv_bn.2} parent=0 // loop_header
    %s11 = sphi 0, %s15
    %p12 = scmp.ge.s32.totalorder %s11, 4
    %s18 = sphi 0, %s37
    %s19 = sphi 0, %s33
    %s20 = sphi 0, %s29
    %s21 = sphi 0, %s18
    %s22 = sphi 0, %s19
    %s23 = sphi 0, %s20
    %s24 = sphi 0, %s21
    %s25 = sphi 0, %s22
    %s26 = sphi 0, %s23
    %s44 = sphi 0, %s46
    %s47 = sphi 0, %s44
    %s48 = sphi 0, %s47
    %s64 = sphi 0, %s48
    %s68 = sphi 0, %s68
    %s70 = sphi 0, %s68
    %s71 = sphi 0, %s70
    %s85 = sphi 0, %s71
    %s95 = sphi 0, %s97
    %s98 = sphi 0, %s95
    %s99 = sphi 0, %s98
    %s115 = sphi 0, %s99
    %s123 = sphi 0, %s125
    %s126 = sphi 0, %s123
    %s127 = sphi 0, %s126
    %s143 = sphi 0, %s127
    %s151 = sphi 0, %s153
    %s154 = sphi 0, %s151
    %s155 = sphi 0, %s154
    %s171 = sphi 0, %s155
  $region4: #{relu_conv_bn.2} parent=0 // loop_header_branch
    %14 = sbr.rel (%p12) target = $region8
  $region5: #{relu_conv_bn.2} parent=0 // loop_body
    %s16 = ssub.s32 %s11, 1
    %s17 = ssub.s32 %s11, 2
    %s27 = sadd.s32 1, %s20
    %p28 = scmp.ge.s32.totalorder %s27, 1
    %s29 = scalar_select %p28, 0, %s27
    %s30 = sadd.s32 1, %s19
    %s31 = scalar_select %p28, %s30, %s19
    %p32 = scmp.ge.s32.totalorder %s31, 2
    %s33 = scalar_select %p32, 0, %s31
    %s34 = sadd.s32 1, %s18
    %s35 = scalar_select %p32, %s34, %s18
    %p36 = scmp.ge.s32.totalorder %s35, 1
    %s37 = scalar_select %p36, 0, %s35
    %s38 = sadd.s32 %s18, %s20
    %s39 = sadd.s32 %s37, %s29
    %s40 = ssub.s32 %s19, %s33
    %s41 = ssub.s32 %s38, %s39
    %s42 = sor.u32 %s40, %s41
    %p43 = scmp.eq.s32.totalorder %s42, 0
    %s45 = sadd.s32 %s44, 1
    %s46 = scalar_select %p43, %s44, %s45
    %p49 = pneg %p43
    %p50 = scmp.eq.s32.totalorder %s11, 1
    %p51 = por %p49, %p50
    %p52 = scmp.ne.s32.totalorder %s44, %s47
    %p53 = scmp.eq.s32.totalorder %s11, 0
    %p54 = por %p52, %p53
    %p55 = scmp.ne.s32.totalorder %s44, %s47
    %p56 = scmp.eq.s32.totalorder %s16, 1
    %p57 = por %p55, %p56
    %p58 = scmp.ne.s32.totalorder %s47, %s48
    %p59 = scmp.eq.s32.totalorder %s16, 0
    %p60 = por %p58, %p59
    %p61 = scmp.ne.s32.totalorder %s47, %s48
    %p62 = scmp.eq.s32.totalorder %s17, 1
    %p63 = por %p61, %p62
    %p65 = scmp.ne.s32.totalorder %s48, %s64
    %p66 = scmp.eq.s32.totalorder %s17, 0
    %p67 = por %p65, %p66
    %s69 = sadd.s32 %s68, 1
    %p72 = scmp.eq.s32.totalorder %s11, 1
    %p73 = scmp.ne.s32.totalorder %s68, %s70
    %p74 = scmp.eq.s32.totalorder %s11, 0
    %p75 = por %p73, %p74
    %p76 = scmp.ne.s32.totalorder %s68, %s70
    %p77 = scmp.eq.s32.totalorder %s16, 1
    %p78 = por %p76, %p77
    %p79 = scmp.ne.s32.totalorder %s70, %s71
    %p80 = scmp.eq.s32.totalorder %s16, 0
    %p81 = por %p79, %p80
    %p82 = scmp.ne.s32.totalorder %s70, %s71
    %p83 = scmp.eq.s32.totalorder %s17, 1
    %p84 = por %p82, %p83
    %p86 = scmp.ne.s32.totalorder %s71, %s85
    %p87 = scmp.eq.s32.totalorder %s17, 0
    %p88 = por %p86, %p87
    %s89 = sadd.s32 %s18, %s20
    %s90 = sadd.s32 %s37, %s29
    %s91 = ssub.s32 %s19, %s33
    %s92 = ssub.s32 %s89, %s90
    %s93 = sor.u32 %s91, %s92
    %p94 = scmp.eq.s32.totalorder %s93, 0
    %s96 = sadd.s32 %s95, 1
    %s97 = scalar_select %p94, %s95, %s96
    %p100 = pneg %p94
    %p101 = scmp.eq.s32.totalorder %s11, 1
    %p102 = por %p100, %p101
    %p103 = scmp.ne.s32.totalorder %s95, %s98
    %p104 = scmp.eq.s32.totalorder %s11, 0
    %p105 = por %p103, %p104
    %p106 = scmp.ne.s32.totalorder %s95, %s98
    %p107 = scmp.eq.s32.totalorder %s16, 1
    %p108 = por %p106, %p107
    %p109 = scmp.ne.s32.totalorder %s98, %s99
    %p110 = scmp.eq.s32.totalorder %s16, 0
    %p111 = por %p109, %p110
    %p112 = scmp.ne.s32.totalorder %s98, %s99
    %p113 = scmp.eq.s32.totalorder %s17, 1
    %p114 = por %p112, %p113
    %p116 = scmp.ne.s32.totalorder %s99, %s115
    %p117 = scmp.eq.s32.totalorder %s17, 0
    %p118 = por %p116, %p117
    %s119 = ssub.s32 %s18, %s37
    %s120 = ssub.s32 %s19, %s33
    %s121 = sor.u32 %s119, %s120
    %p122 = scmp.eq.s32.totalorder %s121, 0
    %s124 = sadd.s32 %s123, 1
    %s125 = scalar_select %p122, %s123, %s124
    %p128 = pneg %p122
    %p129 = scmp.eq.s32.totalorder %s11, 1
    %p130 = por %p128, %p129
    %p131 = scmp.ne.s32.totalorder %s123, %s126
    %p132 = scmp.eq.s32.totalorder %s11, 0
    %p133 = por %p131, %p132
    %p134 = scmp.ne.s32.totalorder %s123, %s126
    %p135 = scmp.eq.s32.totalorder %s16, 1
    %p136 = por %p134, %p135
    %p137 = scmp.ne.s32.totalorder %s126, %s127
    %p138 = scmp.eq.s32.totalorder %s16, 0
    %p139 = por %p137, %p138
    %p140 = scmp.ne.s32.totalorder %s126, %s127
    %p141 = scmp.eq.s32.totalorder %s17, 1
    %p142 = por %p140, %p141
    %p144 = scmp.ne.s32.totalorder %s127, %s143
    %p145 = scmp.eq.s32.totalorder %s17, 0
    %p146 = por %p144, %p145
    %s147 = ssub.s32 %s18, %s37
    %s148 = ssub.s32 %s19, %s33
    %s149 = sor.u32 %s147, %s148
    %p150 = scmp.eq.s32.totalorder %s149, 0
    %s152 = sadd.s32 %s151, 1
    %s153 = scalar_select %p150, %s151, %s152
    %p156 = pneg %p150
    %p157 = scmp.eq.s32.totalorder %s11, 1
    %p158 = por %p156, %p157
    %p159 = scmp.ne.s32.totalorder %s151, %s154
    %p160 = scmp.eq.s32.totalorder %s11, 0
    %p161 = por %p159, %p160
    %p162 = scmp.ne.s32.totalorder %s151, %s154
    %p163 = scmp.eq.s32.totalorder %s16, 1
    %p164 = por %p162, %p163
    %p165 = scmp.ne.s32.totalorder %s154, %s155
    %p166 = scmp.eq.s32.totalorder %s16, 0
    %p167 = por %p165, %p166
    %p168 = scmp.ne.s32.totalorder %s154, %s155
    %p169 = scmp.eq.s32.totalorder %s17, 1
    %p170 = por %p168, %p169
    %p172 = scmp.ne.s32.totalorder %s155, %s171
    %p173 = scmp.eq.s32.totalorder %s17, 0
    %p174 = por %p172, %p173
    %p175 = scmp.le.s32.totalorder 1, %s11
    %p176 = scmp.lt.s32.totalorder %s11, 3
    %p177 = pnand %p175, %p176
    %p178 = pneg %p177
    // Predicated region
    $region9: #{relu_conv_bn.2} parent=5 // pred_check
      _
    $region10: #{relu_conv_bn.2} parent=5 // pred_check_branch
      %180 = sbr.rel (%p177) target = $region12
    $region11: #{relu_conv_bn.2} parent=5 // pred_region
      %s181 = ssub.s32 %s11, 1
      // Predicated region
      $region13: #{relu_conv_bn.2} parent=11 // pred_check
        %p182 = pneg %p81
      $region14: #{relu_conv_bn.2} parent=11 // pred_check_branch
        %184 = sbr.rel (%p182) target = $region16
      $region15: #{relu_conv_bn.2} parent=11 // pred_region
        _
      $region16: #{relu_conv_bn.2} parent=11 // pred_fallthru
        _
    $region12: #{relu_conv_bn.2} parent=5 // pred_fallthru
      _
    %p185 = scmp.lt.s32.totalorder %s11, 2
    // Predicated region
    $region17: #{relu_conv_bn.2} parent=5 // pred_check
      %p186 = pneg %p185
    $region18: #{relu_conv_bn.2} parent=5 // pred_check_branch
      %188 = sbr.rel (%p186) target = $region20
    $region19: #{relu_conv_bn.2} parent=5 // pred_region
      // Predicated region
      $region21: #{relu_conv_bn.2} parent=19 // pred_check
        %p189 = pneg %p54
      $region22: #{relu_conv_bn.2} parent=19 // pred_check_branch
        %191 = sbr.rel (%p189) target = $region24
      $region23: #{relu_conv_bn.2} parent=19 // pred_region
        %s192 = sadd.s32 %s18, %s20
        %s193 = smul.u32 2, %s192
        %p194 = scmp.lt.s32.totalorder %s19, 1
        %s195 = scalar_select %p194, %s19, 1
        %p196 = scmp.lt.s32.totalorder %s193, 1
        %s197 = scalar_select %p196, %s193, 1
        %s198 = smul.addr %s195, 10
        %s199 = sadd.s32 %s197, %s198
        %s200 = smul.addr %s199, 8
        %s201 = scalar_lea.vmem %s0, %s200
        %s202 = sadd.s32 %s18, %s20
        %s203 = smul.u32 2, %s202
      $region24: #{relu_conv_bn.2} parent=19 // pred_fallthru
        _
    $region20: #{relu_conv_bn.2} parent=5 // pred_fallthru
      _
    %p204 = scmp.le.s32.totalorder 1, %s11
    %p205 = scmp.lt.s32.totalorder %s11, 3
    %p206 = pnand %p204, %p205
    %p207 = pneg %p206
    // Predicated region
    $region25: #{relu_conv_bn.2} parent=5 // pred_check
      _
    $region26: #{relu_conv_bn.2} parent=5 // pred_check_branch
      %209 = sbr.rel (%p206) target = $region28
    $region27: #{relu_conv_bn.2} parent=5 // pred_region
      %s210 = ssub.s32 %s11, 1
      %s211 = sadd.s32 %s21, %s23
      %s212 = smul.u32 2, %s211
      %p213 = scmp.lt.s32.totalorder %s22, 1
      %s214 = scalar_select %p213, %s22, 1
      %p215 = scmp.lt.s32.totalorder %s212, 1
      %s216 = scalar_select %p215, %s212, 1
      %s217 = smul.addr %s214, 10
      %s218 = sadd.s32 %s216, %s217
      %s219 = smul.addr %s218, 8
      %s220 = scalar_lea.vmem %s0, %s219
      %p221 = pneg %p60
      %p222 = pneg %p57
      %p223 = pneg %p81
      %p224 = pneg %p78
      %p225 = pneg %p111
      %p226 = pneg %p108
      %s227 = sadd.s32 %s21, %s23
      %s228 = smul.u32 2, %s227
      %p229 = scmp.lt.s32.totalorder %s22, 1
      %s230 = scalar_select %p229, %s22, 1
      %p231 = scmp.lt.s32.totalorder %s228, 1
      %s232 = scalar_select %p231, %s228, 1
      %s233 = smul.addr %s230, 2
      %s234 = sadd.s32 %s232, %s233
      %s235 = smul.addr %s234, 8
      %s236 = scalar_lea.vmem %s2, %s235
      %p237 = pneg %p139
      %p238 = pneg %p136
      %p239 = scmp.lt.s32.totalorder %s21, 0
      %s240 = scalar_select %p239, %s21, 0
      %p241 = scmp.lt.s32.totalorder %s22, 1
      %s242 = scalar_select %p241, %s22, 1
      %s243 = smul.addr %s240, 2
      %s244 = sadd.s32 %s242, %s243
      %s245 = smul.addr %s244, 8
      %s246 = scalar_lea.vmem %s3, %s245
      %p247 = pneg %p167
      %p248 = pneg %p164
      %p249 = scmp.lt.s32.totalorder %s21, 0
      %s250 = scalar_select %p249, %s21, 0
      %p251 = scmp.lt.s32.totalorder %s22, 1
      %s252 = scalar_select %p251, %s22, 1
      %s253 = smul.addr %s250, 2
      %s254 = sadd.s32 %s252, %s253
      %s255 = smul.addr %s254, 8
      %s256 = scalar_lea.vmem %s4, %s255
      %s257 = sadd.s32 %s21, %s23
      %s258 = smul.u32 2, %s257
      %p259 = scmp.lt.s32.totalorder %s22, 1
      %s260 = scalar_select %p259, %s22, 1
      %p261 = scmp.lt.s32.totalorder %s258, 1
      %s262 = scalar_select %p261, %s258, 1
      %s263 = smul.addr %s260, 10
      %s264 = sadd.s32 %s262, %s263
      %s265 = smul.addr %s264, 8
      %s266 = scalar_lea.vmem %s0, %s265
      %s267 = sadd.s32 %s21, %s23
      %s268 = smul.u32 2, %s267
      %s269 = sadd.s32 %s21, %s23
      %s270 = smul.u32 2, %s269
      %p271 = scmp.lt.s32.totalorder %s22, 1
      %s272 = scalar_select %p271, %s22, 1
      %p273 = scmp.lt.s32.totalorder %s270, 1
      %s274 = scalar_select %p273, %s270, 1
      %s275 = smul.addr %s272, 2
      %s276 = sadd.s32 %s274, %s275
      %s277 = smul.addr %s276, 8
      %s278 = scalar_lea.vmem %s2, %s277
      %s279 = sadd.s32 %s21, %s23
      %s280 = smul.u32 2, %s279
      %p281 = scmp.lt.s32.totalorder %s21, 0
      %s282 = scalar_select %p281, %s21, 0
      %p283 = scmp.lt.s32.totalorder %s22, 1
      %s284 = scalar_select %p283, %s22, 1
      %s285 = smul.addr %s282, 2
      %s286 = sadd.s32 %s284, %s285
      %s287 = smul.addr %s286, 8
      %s288 = scalar_lea.vmem %s3, %s287
      %p289 = scmp.lt.s32.totalorder %s21, 0
      %s290 = scalar_select %p289, %s21, 0
      %p291 = scmp.lt.s32.totalorder %s22, 1
      %s292 = scalar_select %p291, %s22, 1
      %s293 = smul.addr %s290, 2
      %s294 = sadd.s32 %s292, %s293
      %s295 = smul.addr %s294, 8
      %s296 = scalar_lea.vmem %s4, %s295
      %v297 = vld [vmem:[%s266] sm:$0xff]
      %v298 = vld [vmem:[%s266 + $0x8] sm:$0xff]
      %v299 = vld [vmem:[%s266 + $0x10] sm:$0xff]
      %v300 = vld [vmem:[%s266 + $0x18] sm:$0xff]
      %v301 = vld [vmem:[%s266 + $0x20] sm:$0xff]
      %v302 = vld [vmem:[%s266 + $0x28] sm:$0xff]
      %v303 = vld [vmem:[%s266 + $0x30] sm:$0xff]
      %v304 = vld [vmem:[%s266 + $0x38] sm:$0xff]
      %v305 = vld [vmem:[%s266 + $0x40] sm:$0xf]
      %v306 = vld [vmem:[%s266 + $0x48] sm:$0xf]
      %v307 = vld [vmem:[%s1] sm:$0xff]
      %vm308 = vcmask 293888
      %v310 = vsel %vm308, %v307, 0
      %vm312 = vcmask 1043456
      %v314 = vsel %vm312, %v305, 0
      %v317 = vsel %vm312, %v306, 0
      %319 = vmatprep.subr.mxu0 %v298
      %320 = vmatpush1.msra.mxu0 %v297
      %321 = vmatprep.subr.mxu0 %v300
      %322 = vmatpush1.msra.mxu0 %v299
      %323 = vmatprep.subr.mxu0 %v302
      %324 = vmatpush1.msra.mxu0 %v301
      %325 = vmatprep.subr.mxu0 %v304
      %326 = vmatpush1.msra.mxu0 %v303
      %327 = vmatprep.subr.mxu0 %v317
      %328 = vmatpush1.msra.mxu0 %v314
      %329 = vmatprep.subr.mxu0 0.0
      %330 = vmatpush1.msra.mxu0 0.0
      %331 = vmatprep.subr.mxu0 0.0
      %332 = vmatpush1.msra.mxu0 0.0
      %333 = vmatprep.subr.mxu0 0.0
      %334 = vmatpush1.msra.mxu0 0.0
      %335 = vmatprep.subr.mxu0 0.0
      %336 = vmatpush1.msra.mxu0 0.0
      %337 = vmatprep.subr.mxu0 0.0
      %338 = vmatpush1.msra.mxu0 0.0
      %339 = vmatprep.subr.mxu0 0.0
      %340 = vmatpush1.msra.mxu0 0.0
      %341 = vmatprep.subr.mxu0 0.0
      %342 = vmatpush1.msra.mxu0 0.0
      %343 = vmatprep.subr.mxu0 0.0
      %344 = vmatpush1.msra.mxu0 0.0
      %345 = vmatprep.subr.mxu0 0.0
      %346 = vmatpush1.msra.mxu0 0.0
      %347 = vmatprep.subr.mxu0 0.0
      %348 = vmatpush1.msra.mxu0 0.0
      %349 = vmatprep.subr.mxu0 0.0
      %350 = vmatpush1.msra.mxu0 0.0
      %351 = vmatprep.subr.mxu0 0.0
      %352 = vmatpush1.msra.mxu0 0.0
      %353 = vmatprep.subr.mxu0 0.0
      %354 = vmatpush1.msra.mxu0 0.0
      %355 = vmatprep.subr.mxu0 0.0
      %356 = vmatpush1.msra.mxu0 0.0
      %357 = vmatprep.subr.mxu0 0.0
      %358 = vmatpush1.msra.mxu0 0.0
      %359 = vmatprep.subr.mxu0 0.0
      %360 = vmatpush1.msra.mxu0 0.0
      %361 = vmatprep.subr.mxu0 0.0
      %362 = vmatpush1.msra.mxu0 0.0
      %363 = vmatprep.subr.mxu0 0.0
      %364 = vmatpush1.msra.mxu0 0.0
      %365 = vmatprep.subr.mxu0 0.0
      %366 = vmatpush1.msra.mxu0 0.0
      %367 = vmatprep.subr.mxu0 0.0
      %368 = vmatpush1.msra.mxu0 0.0
      %369 = vmatprep.subr.mxu0 0.0
      %370 = vmatpush1.msra.mxu0 0.0
      %371 = vmatprep.subr.mxu0 0.0
      %372 = vmatpush1.msra.mxu0 0.0
      %373 = vmatprep.subr.mxu0 0.0
      %374 = vmatpush1.msra.mxu0 0.0
      %375 = vmatprep.subr.mxu0 0.0
      %376 = vmatpush1.msra.mxu0 0.0
      %377 = vmatprep.subr.mxu0 0.0
      %378 = vmatpush1.msra.mxu0 0.0
      %379 = vmatprep.subr.mxu0 0.0
      %380 = vmatpush1.msra.mxu0 0.0
      %381 = vmatprep.subr.mxu0 0.0
      %382 = vmatpush1.msra.mxu0 0.0
      %383 = vmatprep.mubr.f32.mxu0 0.0
      %384 = vmatmul.mubr.f32.gmra.mrb[0].mxu0 %v310
      %v385 = vpop.f32.mrb[0].mxu0
      %v386 = vadd.f32 0.0, %v385
      %v387 = vpop.f32.mrb[0].mxu0
      %v388 = vadd.f32 0.0, %v387
      %389 = vdwg.mxu0
      %390 = vst [vmem:[%s278] sm:$0xff] %v386
      %391 = vst [vmem:[%s278 + $0x8] sm:$0xff] %v388
      %p392 = scmp.eq.s32.totalorder %s23, 0
      // Predicated region
      $region29: #{relu_conv_bn.2} parent=27 // pred_check
        %p393 = pneg %p392
      $region30: #{relu_conv_bn.2} parent=27 // pred_check_branch
        %395 = sbr.rel (%p393) target = $region32
      $region31: #{relu_conv_bn.2} parent=27 // pred_region
        %vm396 = vcmask 7168
        %397 = vst.msk [vmem:[%s288] sm:$0xff] %vm396, 0.0
        %398 = vst.msk [vmem:[%s296] sm:$0xff] %vm396, 0.0
      $region32: #{relu_conv_bn.2} parent=27 // pred_fallthru
        _
      %v399 = vld [vmem:[%s288] sm:$0xff]
      %v400 = vadd.f32 %v386, %v388
      %401 = vadd.xlane.f32.xlu0 %v400
      %v402 = vpop.xlane.xlu0 %401
      %v403 = vadd.f32 %v399, %v402
      %vm404 = vcmask 7168
      %405 = vst.msk [vmem:[%s288] sm:$0xff] %vm404, %v403
      %v406 = vld [vmem:[%s296] sm:$0xff]
      %v407 = vmul.f32 %v386, %v386
      %v408 = vmul.f32 %v388, %v388
      %v409 = vadd.f32 %v407, %v408
      %410 = vadd.xlane.f32.xlu0 %v409
      %v411 = vpop.xlane.xlu0 %410
      %v412 = vadd.f32 %v406, %v411
      %413 = vst.msk [vmem:[%s296] sm:$0xff] %vm404, %v412
      %s414 = sadd.s32 %s21, %s23
      %s415 = smul.u32 2, %s414
      %p416 = scmp.lt.s32.totalorder %s22, 1
      %s417 = scalar_select %p416, %s22, 1
      %p418 = scmp.lt.s32.totalorder %s415, 1
      %s419 = scalar_select %p418, %s415, 1
      %s420 = smul.addr %s417, 2
      %s421 = sadd.s32 %s419, %s420
      %s422 = smul.addr %s421, 8
      %s423 = scalar_lea.vmem %s2, %s422
      %p424 = scmp.lt.s32.totalorder %s21, 0
      %s425 = scalar_select %p424, %s21, 0
      %p426 = scmp.lt.s32.totalorder %s22, 1
      %s427 = scalar_select %p426, %s22, 1
      %s428 = smul.addr %s425, 2
      %s429 = sadd.s32 %s427, %s428
      %s430 = smul.addr %s429, 8
      %s431 = scalar_lea.vmem %s3, %s430
      %p432 = scmp.lt.s32.totalorder %s21, 0
      %s433 = scalar_select %p432, %s21, 0
      %p434 = scmp.lt.s32.totalorder %s22, 1
      %s435 = scalar_select %p434, %s22, 1
      %s436 = smul.addr %s433, 2
      %s437 = sadd.s32 %s435, %s436
      %s438 = smul.addr %s437, 8
      %s439 = scalar_lea.vmem %s4, %s438
      // Predicated region
      $region33: #{relu_conv_bn.2} parent=27 // pred_check
        %p440 = pneg %p108
      $region34: #{relu_conv_bn.2} parent=27 // pred_check_branch
        %442 = sbr.rel (%p440) target = $region36
      $region35: #{relu_conv_bn.2} parent=27 // pred_region
        %s443 = sadd.s32 %s21, %s23
        %s444 = smul.u32 2, %s443
      $region36: #{relu_conv_bn.2} parent=27 // pred_fallthru
        _
      // Predicated region
      $region37: #{relu_conv_bn.2} parent=27 // pred_check
        %p445 = pneg %p136
      $region38: #{relu_conv_bn.2} parent=27 // pred_check_branch
        %447 = sbr.rel (%p445) target = $region40
      $region39: #{relu_conv_bn.2} parent=27 // pred_region
        _
      $region40: #{relu_conv_bn.2} parent=27 // pred_fallthru
        _
      // Predicated region
      $region41: #{relu_conv_bn.2} parent=27 // pred_check
        %p448 = pneg %p164
      $region42: #{relu_conv_bn.2} parent=27 // pred_check_branch
        %450 = sbr.rel (%p448) target = $region44
      $region43: #{relu_conv_bn.2} parent=27 // pred_region
        _
      $region44: #{relu_conv_bn.2} parent=27 // pred_fallthru
        _
    $region28: #{relu_conv_bn.2} parent=5 // pred_fallthru
      _
    %p451 = scmp.le.s32.totalorder 2, %s11
    // Predicated region
    $region45: #{relu_conv_bn.2} parent=5 // pred_check
      %p452 = pneg %p451
    $region46: #{relu_conv_bn.2} parent=5 // pred_check_branch
      %454 = sbr.rel (%p452) target = $region48
    $region47: #{relu_conv_bn.2} parent=5 // pred_region
      %s455 = ssub.s32 %s11, 2
      // Predicated region
      $region49: #{relu_conv_bn.2} parent=47 // pred_check
        %p456 = pneg %p114
      $region50: #{relu_conv_bn.2} parent=47 // pred_check_branch
        %458 = sbr.rel (%p456) target = $region52
      $region51: #{relu_conv_bn.2} parent=47 // pred_region
        %s459 = sadd.s32 %s24, %s26
        %s460 = smul.u32 2, %s459
        %p461 = scmp.lt.s32.totalorder %s25, 1
        %s462 = scalar_select %p461, %s25, 1
        %p463 = scmp.lt.s32.totalorder %s460, 1
        %s464 = scalar_select %p463, %s460, 1
        %s465 = smul.addr %s462, 2
        %s466 = sadd.s32 %s464, %s465
        %s467 = smul.addr %s466, 8
        %s468 = scalar_lea.vmem %s2, %s467
      $region52: #{relu_conv_bn.2} parent=47 // pred_fallthru
        _
      // Predicated region
      $region53: #{relu_conv_bn.2} parent=47 // pred_check
        %p469 = pneg %p142
      $region54: #{relu_conv_bn.2} parent=47 // pred_check_branch
        %471 = sbr.rel (%p469) target = $region56
      $region55: #{relu_conv_bn.2} parent=47 // pred_region
        %p472 = scmp.lt.s32.totalorder %s24, 0
        %s473 = scalar_select %p472, %s24, 0
        %p474 = scmp.lt.s32.totalorder %s25, 1
        %s475 = scalar_select %p474, %s25, 1
        %s476 = smul.addr %s473, 2
        %s477 = sadd.s32 %s475, %s476
        %s478 = smul.addr %s477, 8
        %s479 = scalar_lea.vmem %s3, %s478
      $region56: #{relu_conv_bn.2} parent=47 // pred_fallthru
        _
      // Predicated region
      $region57: #{relu_conv_bn.2} parent=47 // pred_check
        %p480 = pneg %p170
      $region58: #{relu_conv_bn.2} parent=47 // pred_check_branch
        %482 = sbr.rel (%p480) target = $region60
      $region59: #{relu_conv_bn.2} parent=47 // pred_region
        %p483 = scmp.lt.s32.totalorder %s24, 0
        %s484 = scalar_select %p483, %s24, 0
        %p485 = scmp.lt.s32.totalorder %s25, 1
        %s486 = scalar_select %p485, %s25, 1
        %s487 = smul.addr %s484, 2
        %s488 = sadd.s32 %s486, %s487
        %s489 = smul.addr %s488, 8
        %s490 = scalar_lea.vmem %s4, %s489
      $region60: #{relu_conv_bn.2} parent=47 // pred_fallthru
        _
    $region48: #{relu_conv_bn.2} parent=5 // pred_fallthru
      _
  $region6: #{relu_conv_bn.2} parent=0 // loop_footer
    %s15 = sadd.s32 1, %s11
  $region7: #{relu_conv_bn.2} parent=0 // loop_footer_branch
    %10 = sbr.rel target = $region3
  $region8: #{relu_conv_bn.2} parent=0 // loop_exit
    _

</llo_original>
